<compile_context>
chip_gen: v6e
topology: v6e:2x2x1
jax: 0.10.0
libtpu: 0.0.40
codegen_flags: <defaults>
</compile_context>

<pallas_src>
import functools

import jax
import jax.numpy as jnp
import numpy as np
from jax.experimental import pallas as pl
from jax.experimental.pallas import tpu as pltpu

_LANE = 128
_SUBLANE = 8


def _round_up(x, m):
    return -(-x // m) * m


def _dwconv_bn_pw_kernel(x_ref, wdw_ref, wpw_ref, b_ref, o_ref, dw_ref, *,
                         K, stride, Ho, Wo, mxu_dtype):
    """Fused depthwise(VPU) + BN(folded) + 1x1 conv(MXU) for one batch element.

    x_ref  : (stride*stride, Hph, Wph, C_in)  phase-decomposed padded input
    wdw_ref: (K*K, C_in)                      BN-folded depthwise weights
    wpw_ref: (C_in, C_out_tile)               pointwise weights (f32 or bf16)
    b_ref  : (1, C_out_tile)                  fused output bias
    o_ref  : (Ho, Wo, C_out_tile)             output tile
    dw_ref : (Ho*Wo, C_in) f32 VMEM scratch   depthwise result, reused per tile
    """
    co = pl.program_id(1)
    c_in = x_ref.shape[-1]
    M = Ho * Wo

    # ---- Depthwise on the VPU, computed once per batch element -------------
    @pl.when(co == 0)
    def _():
        wdw = wdw_ref[...].astype(jnp.float32)            # (K*K, C_in)
        dw = None
        for i in range(K):                                # static K*K unroll
            for j in range(K):
                ih, ph = i // stride, i % stride
                jw, qw = j // stride, j % stride
                patch = x_ref[ph * stride + qw, pl.ds(ih, Ho), pl.ds(jw, Wo), :]
                patch2d = patch.astype(jnp.float32).reshape(M, c_in)
                contrib = patch2d * wdw[i * K + j:i * K + j + 1, :]
                dw = contrib if dw is None else dw + contrib
        dw_ref[...] = dw

    # ---- Single pointwise matmul on the MXU (bias fused in the epilogue) ---
    lhs = dw_ref[...].astype(mxu_dtype)
    rhs = wpw_ref[...]
    out = jnp.dot(lhs, rhs, preferred_element_type=jnp.float32) + b_ref[...]
    o_ref[...] = out.reshape(Ho, Wo, o_ref.shape[-1]).astype(o_ref.dtype)


def _block_spec(shape, index_map, buffers=None):
    """BlockSpec helper; requests single-buffering when supported."""
    if buffers is not None:
        try:
            return pl.BlockSpec(shape, index_map,
                                pipeline_mode=pl.Buffered(buffers))
        except (TypeError, AttributeError):
            pass
    return pl.BlockSpec(shape, index_map)


def _tiled_block_bytes(shape, dtype):
    """VMEM bytes of one block, accounting for (sublane, 128)-tiled layout."""
    dims = [int(d) for d in shape if d is not None]
    itemsize = jnp.dtype(dtype).itemsize
    sub = 8 * max(1, 4 // itemsize)          # 8 for f32, 16 for bf16, 32 for i8
    dims[-1] = _round_up(dims[-1], _LANE)
    if len(dims) >= 2:
        dims[-2] = _round_up(dims[-2], sub)
    n = 1
    for d in dims:
        n *= d
    return n * itemsize


def depthwise_conv2d_forward(x_nchw, params, *, kernel_size, padding, stride,
                             eps=1e-5, use_bf16_mxu=False, cout_tile=None):
    """Forward pass of the PyTorch DepthWiseConv2d module. Input/output NCHW."""
    wdw = params["wdw"]      # (C_in, 1, K, K)
    bdw = params["bdw"]      # (C_in,)
    gamma = params["gamma"]  # (C_in,)
    beta = params["beta"]    # (C_in,)
    rmean = params["rmean"]  # (C_in,)
    rvar = params["rvar"]    # (C_in,)
    wpw = params["wpw"]      # (C_out, C_in, 1, 1)
    bpw = params["bpw"]      # (C_out,)

    N, C_in, H, W = x_nchw.shape
    C_out = wpw.shape[0]
    K = kernel_size
    s = stride

    # ---- Fold BN + depthwise bias into the weights (host-side, tiny) -------
    bn_scale = gamma / jnp.sqrt(rvar + eps)                  # (C_in,)
    bn_shift = beta - rmean * bn_scale                       # (C_in,)
    wdw_hwc = jnp.transpose(wdw[:, 0], (1, 2, 0))            # (K, K, C_in)
    wdw_fold = (wdw_hwc * bn_scale[None, None, :]).reshape(K * K, C_in)
    wpw_io = jnp.transpose(wpw[:, :, 0, 0], (1, 0))          # (C_in, C_out)
    chan_const = bdw * bn_scale + bn_shift                   # (C_in,)
    bias_fused = chan_const @ wpw_io + bpw                   # (C_out,)

    # ---- Lane-pad output channels; choose a C_out tile ----------------------
    C_out_p = _round_up(C_out, _LANE)
    if C_out_p != C_out:
        wpw_io = jnp.pad(wpw_io, ((0, 0), (0, C_out_p - C_out)))
        bias_fused = jnp.pad(bias_fused, (0, C_out_p - C_out))
    if cout_tile is None:
        cout_tile = C_out_p if C_out_p <= 512 else (
            256 if C_out_p % 256 == 0 else 128)
    assert C_out_p % cout_tile == 0 and cout_tile % _LANE == 0
    n_co = C_out_p // cout_tile

    mxu_dtype = jnp.bfloat16 if use_bf16_mxu else jnp.float32
    wpw_io = wpw_io.astype(mxu_dtype)
    bias_fused = bias_fused.astype(jnp.float32).reshape(1, C_out_p)

    # ---- NCHW -> NHWC, spatial pad, Wo padded to 8, stride-phase decompose --
    x = jnp.transpose(x_nchw, (0, 2, 3, 1))
    x_pad = jnp.pad(x, ((0, 0), (padding, padding), (padding, padding), (0, 0)))
    Hp, Wp = x_pad.shape[1], x_pad.shape[2]
    Ho = (Hp - K) // s + 1
    Wo = (Wp - K) // s + 1
    Wo_p = _round_up(Wo, _SUBLANE)          # padded output width (sublane-clean)
    halo = (K - 1) // s
    Hph, Wph = Ho + halo, Wo_p + halo
    th, tw = Hph * s, Wph * s
    x_pad = jnp.pad(x_pad, ((0, 0), (0, max(0, th - Hp)),
                            (0, max(0, tw - Wp)), (0, 0)))
    x_pad = x_pad[:, :th, :tw, :]
    if s == 1:
        x_ph = x_pad[:, None]                               # free reshape
    else:
        # phase layout: x_ph[n, p*s+q, h, w, c] = x_pad[n, h*s+p, w*s+q, c]
        x_ph = x_pad.reshape(N, Hph, s, Wph, s, C_in)
        x_ph = jnp.transpose(x_ph, (0, 2, 4, 1, 3, 5)).reshape(
            N, s * s, Hph, Wph, C_in)
    if use_bf16_mxu:
        x_ph = x_ph.astype(jnp.bfloat16)    # halves input DMA on v6e/v7x

    # ---- VMEM budget with tiled-layout padding; cap from hardware info ------
    vmem_need = (
        2 * _tiled_block_bytes((s * s, Hph, Wph, C_in), x_ph.dtype)      # input
        + 2 * _tiled_block_bytes((Ho, Wo_p, cout_tile), x_nchw.dtype)    # output
        + 1 * _tiled_block_bytes((K * K, C_in), jnp.float32)             # wdw
        + 2 * _tiled_block_bytes((C_in, cout_tile), mxu_dtype)           # wpw
        + 2 * _tiled_block_bytes((1, cout_tile), jnp.float32)            # bias
        + _tiled_block_bytes((Ho * Wo_p, C_in), jnp.float32)             # scratch
        + (2 << 20))                                                     # margin
    try:
        vmem_cap = int(pltpu.get_tpu_info().vmem_capacity_bytes)
    except Exception:  # pragma: no cover - conservative fallback
        vmem_cap = 128 * 1024 * 1024
    vmem_limit = int(min(int(0.9 * vmem_cap),
                         max(vmem_need, 32 * 1024 * 1024)))

    kernel = functools.partial(_dwconv_bn_pw_kernel, K=K, stride=s,
                               Ho=Ho, Wo=Wo_p, mxu_dtype=mxu_dtype)

    in_specs = [
        _block_spec((None, s * s, Hph, Wph, C_in), lambda n, co: (n, 0, 0, 0, 0)),
        _block_spec((K * K, C_in), lambda n, co: (0, 0), buffers=1),
        _block_spec((C_in, cout_tile), lambda n, co: (0, co),
                    buffers=1 if n_co == 1 else None),
        _block_spec((1, cout_tile), lambda n, co: (0, co),
                    buffers=1 if n_co == 1 else None),
    ]
    out_spec = pl.BlockSpec((None, Ho, Wo_p, cout_tile),
                            lambda n, co: (n, 0, 0, co))

    out_nhwc = pl.pallas_call(
        kernel,
        out_shape=jax.ShapeDtypeStruct((N, Ho, Wo_p, C_out_p), x_nchw.dtype),
        grid_spec=pltpu.PrefetchScalarGridSpec(
            num_scalar_prefetch=0,
            grid=(N, n_co),
            in_specs=in_specs,
            out_specs=out_spec,
            scratch_shapes=[pltpu.VMEM((Ho * Wo_p, C_in), jnp.float32)]),
        compiler_params=pltpu.CompilerParams(
            dimension_semantics=("parallel", "arbitrary"),
            vmem_limit_bytes=vmem_limit),
    )(x_ph, wdw_fold, wpw_io, bias_fused)

    out_nhwc = out_nhwc[:, :, :Wo, :C_out]           # drop Wo / C_out padding
    return jnp.transpose(out_nhwc, (0, 3, 1, 2))     # back to NCHW


def _reference_forward(x_nchw, params, *, kernel_size, padding, stride,
                       eps=1e-5):
    """Pure-JAX reference (lax conv) to validate the Pallas kernel."""
    wdw, bdw = params["wdw"], params["bdw"]
    gamma, beta = params["gamma"], params["beta"]
    rmean, rvar = params["rmean"], params["rvar"]
    wpw, bpw = params["wpw"], params["bpw"]
    C_in = x_nchw.shape[1]

    y = jax.lax.conv_general_dilated(
        x_nchw, wdw, window_strides=(stride, stride),
        padding=[(padding, padding), (padding, padding)],
        feature_group_count=C_in,
        dimension_numbers=("NCHW", "OIHW", "NCHW"))
    y = y + bdw[None, :, None, None]
    scale = gamma / jnp.sqrt(rvar + eps)
    shift = beta - rmean * scale
    y = y * scale[None, :, None, None] + shift[None, :, None, None]
    z = jax.lax.conv_general_dilated(
        y, wpw, window_strides=(1, 1), padding="VALID",
        dimension_numbers=("NCHW", "OIHW", "NCHW"))
    return z + bpw[None, :, None, None]


if __name__ == "__main__":
    def make_inputs(key, N, C_in, C_out, H, W, K):
        ks = jax.random.split(key, 9)
        x = jax.random.normal(ks[0], (N, C_in, H, W), jnp.float32)
        params = dict(
            wdw=jax.random.normal(ks[1], (C_in, 1, K, K), jnp.float32) * 0.3,
            bdw=jax.random.normal(ks[2], (C_in,), jnp.float32) * 0.1,
            gamma=jax.random.uniform(ks[3], (C_in,), jnp.float32,
                                     minval=0.5, maxval=1.5),
            beta=jax.random.normal(ks[4], (C_in,), jnp.float32) * 0.1,
            rmean=jax.random.normal(ks[5], (C_in,), jnp.float32) * 0.1,
            rvar=jax.random.uniform(ks[6], (C_in,), jnp.float32,
                                    minval=0.5, maxval=1.5),
            wpw=jax.random.normal(ks[7], (C_out, C_in, 1, 1), jnp.float32) * 0.3,
            bpw=jax.random.normal(ks[8], (C_out,), jnp.float32) * 0.1,
        )
        return x, params

    # (N, C_in, C_out, H, W, K, padding, stride, cout_tile)
    cases = [
        (2, 4, 8, 16, 16, 3, 1, 2, None),   # CvT-style k/v projection, stride 2
        (2, 4, 8, 14, 14, 3, 1, 1, None),   # stride 1, Wo not a multiple of 8
        (1, 8, 200, 12, 12, 3, 1, 1, 128),  # C_out tiling (n_co > 1), batch 1
    ]

    key = jax.random.PRNGKey(0)
    keys = jax.random.split(key, len(cases))
    for ck, (N, C_in, C_out, H, W, K, pad, s, tco) in zip(keys, cases):
        x, params = make_inputs(ck, N, C_in, C_out, H, W, K)
        ref = _reference_forward(x, params, kernel_size=K, padding=pad, stride=s)

        # Exact-precision path (f32 MXU).
        out = depthwise_conv2d_forward(x, params, kernel_size=K, padding=pad,
                                       stride=s, use_bf16_mxu=False,
                                       cout_tile=tco)
        out = jax.block_until_ready(out)
        np.testing.assert_allclose(np.asarray(out), np.asarray(ref),
                                   rtol=1e-4, atol=1e-4)

        # bf16 MXU fast path (v6e/v7x); looser tolerance for bf16 rounding.
        out_bf = depthwise_conv2d_forward(x, params, kernel_size=K, padding=pad,
                                          stride=s, use_bf16_mxu=True,
                                          cout_tile=tco)
        out_bf = jax.block_until_ready(out_bf)
        np.testing.assert_allclose(np.asarray(out_bf), np.asarray(ref),
                                   rtol=5e-2, atol=5e-2)

    print("KERNEL_OK")
</pallas_src>

<mosaic_0001>
module attributes {stable_mosaic.version = 11 : i64} {
  func.func @_dwconv_bn_pw_kernel(%arg0: i32, %arg1: i32, %arg2: memref<1x4x9x9x4xf32, #tpu.memory_space<vmem>>, %arg3: memref<9x4xf32, #tpu.memory_space<vmem>>, %arg4: memref<4x128xf32, #tpu.memory_space<vmem>>, %arg5: memref<1x128xf32, #tpu.memory_space<vmem>>, %arg6: memref<1x8x8x128xf32, #tpu.memory_space<vmem>>, %arg7: memref<64x4xf32, #tpu.memory_space<vmem>>) attributes {dimension_semantics = [#tpu.dimension_semantics<parallel>, #tpu.dimension_semantics<arbitrary>], iteration_bounds = array<i64: 2, 1>, scalar_prefetch = 0 : i64, scratch_operands = 1 : i64, tpu.core_type = #tpu.core_type<tc>, window_params = [{transform_indices = @transform_0, window_bounds = array<i64: 1, 4, 9, 9, 4>}, {pipeline_mode = #tpu.pipeline_mode<synchronous>, transform_indices = @transform_1, window_bounds = array<i64: 9, 4>}, {pipeline_mode = #tpu.pipeline_mode<synchronous>, transform_indices = @transform_2, window_bounds = array<i64: 4, 128>}, {pipeline_mode = #tpu.pipeline_mode<synchronous>, transform_indices = @transform_3, window_bounds = array<i64: 1, 128>}, {transform_indices = @transform_4, window_bounds = array<i64: 1, 8, 8, 128>}]} {
    %c0_i32 = arith.constant 0 : i32
    %0 = arith.cmpi eq, %arg1, %c0_i32 : i32
    %1 = arith.extui %0 : i1 to i32
    %c0_i32_0 = arith.constant 0 : i32
    %2 = arith.cmpi ne, %1, %c0_i32_0 : i32
    scf.if %2 {
      %c0_10 = arith.constant 0 : index
      %c0_11 = arith.constant 0 : index
      %13 = vector.load %arg3[%c0_10, %c0_11] : memref<9x4xf32, #tpu.memory_space<vmem>>, vector<9x4xf32>
      %c0_12 = arith.constant 0 : index
      %c0_13 = arith.constant 0 : index
      %c0_14 = arith.constant 0 : index
      %c0_15 = arith.constant 0 : index
      %c0_16 = arith.constant 0 : index
      %14 = vector.load %arg2[%c0_12, %c0_13, %c0_14, %c0_15, %c0_16] : memref<1x4x9x9x4xf32, #tpu.memory_space<vmem>>, vector<1x1x8x8x4xf32>
      %15 = vector.shape_cast %14 : vector<1x1x8x8x4xf32> to vector<8x8x4xf32>
      %16 = vector.shape_cast %15 : vector<8x8x4xf32> to vector<64x4xf32>
      %17 = vector.extract_strided_slice %13 {offsets = [0, 0], sizes = [1, 4], strides = [1, 1]} : vector<9x4xf32> to vector<1x4xf32>
      %18 = vector.broadcast %17 : vector<1x4xf32> to vector<64x4xf32>
      %19 = arith.mulf %16, %18 : vector<64x4xf32>
      %c0_17 = arith.constant 0 : index
      %c1 = arith.constant 1 : index
      %c0_18 = arith.constant 0 : index
      %c0_19 = arith.constant 0 : index
      %c0_20 = arith.constant 0 : index
      %20 = vector.load %arg2[%c0_17, %c1, %c0_18, %c0_19, %c0_20] : memref<1x4x9x9x4xf32, #tpu.memory_space<vmem>>, vector<1x1x8x8x4xf32>
      %21 = vector.shape_cast %20 : vector<1x1x8x8x4xf32> to vector<8x8x4xf32>
      %22 = vector.shape_cast %21 : vector<8x8x4xf32> to vector<64x4xf32>
      %23 = vector.extract_strided_slice %13 {offsets = [1, 0], sizes = [1, 4], strides = [1, 1]} : vector<9x4xf32> to vector<1x4xf32>
      %24 = vector.broadcast %23 : vector<1x4xf32> to vector<64x4xf32>
      %25 = arith.mulf %22, %24 : vector<64x4xf32>
      %26 = arith.addf %19, %25 : vector<64x4xf32>
      %c0_21 = arith.constant 0 : index
      %c0_22 = arith.constant 0 : index
      %c0_23 = arith.constant 0 : index
      %c1_24 = arith.constant 1 : index
      %c0_25 = arith.constant 0 : index
      %27 = vector.load %arg2[%c0_21, %c0_22, %c0_23, %c1_24, %c0_25] : memref<1x4x9x9x4xf32, #tpu.memory_space<vmem>>, vector<1x1x8x8x4xf32>
      %28 = vector.shape_cast %27 : vector<1x1x8x8x4xf32> to vector<8x8x4xf32>
      %29 = vector.shape_cast %28 : vector<8x8x4xf32> to vector<64x4xf32>
      %30 = vector.extract_strided_slice %13 {offsets = [2, 0], sizes = [1, 4], strides = [1, 1]} : vector<9x4xf32> to vector<1x4xf32>
      %31 = vector.broadcast %30 : vector<1x4xf32> to vector<64x4xf32>
      %32 = arith.mulf %29, %31 : vector<64x4xf32>
      %33 = arith.addf %26, %32 : vector<64x4xf32>
      %c0_26 = arith.constant 0 : index
      %c2 = arith.constant 2 : index
      %c0_27 = arith.constant 0 : index
      %c0_28 = arith.constant 0 : index
      %c0_29 = arith.constant 0 : index
      %34 = vector.load %arg2[%c0_26, %c2, %c0_27, %c0_28, %c0_29] : memref<1x4x9x9x4xf32, #tpu.memory_space<vmem>>, vector<1x1x8x8x4xf32>
      %35 = vector.shape_cast %34 : vector<1x1x8x8x4xf32> to vector<8x8x4xf32>
      %36 = vector.shape_cast %35 : vector<8x8x4xf32> to vector<64x4xf32>
      %37 = vector.extract_strided_slice %13 {offsets = [3, 0], sizes = [1, 4], strides = [1, 1]} : vector<9x4xf32> to vector<1x4xf32>
      %38 = vector.broadcast %37 : vector<1x4xf32> to vector<64x4xf32>
      %39 = arith.mulf %36, %38 : vector<64x4xf32>
      %40 = arith.addf %33, %39 : vector<64x4xf32>
      %c0_30 = arith.constant 0 : index
      %c3 = arith.constant 3 : index
      %c0_31 = arith.constant 0 : index
      %c0_32 = arith.constant 0 : index
      %c0_33 = arith.constant 0 : index
      %41 = vector.load %arg2[%c0_30, %c3, %c0_31, %c0_32, %c0_33] : memref<1x4x9x9x4xf32, #tpu.memory_space<vmem>>, vector<1x1x8x8x4xf32>
      %42 = vector.shape_cast %41 : vector<1x1x8x8x4xf32> to vector<8x8x4xf32>
      %43 = vector.shape_cast %42 : vector<8x8x4xf32> to vector<64x4xf32>
      %44 = vector.extract_strided_slice %13 {offsets = [4, 0], sizes = [1, 4], strides = [1, 1]} : vector<9x4xf32> to vector<1x4xf32>
      %45 = vector.broadcast %44 : vector<1x4xf32> to vector<64x4xf32>
      %46 = arith.mulf %43, %45 : vector<64x4xf32>
      %47 = arith.addf %40, %46 : vector<64x4xf32>
      %c0_34 = arith.constant 0 : index
      %c2_35 = arith.constant 2 : index
      %c0_36 = arith.constant 0 : index
      %c1_37 = arith.constant 1 : index
      %c0_38 = arith.constant 0 : index
      %48 = vector.load %arg2[%c0_34, %c2_35, %c0_36, %c1_37, %c0_38] : memref<1x4x9x9x4xf32, #tpu.memory_space<vmem>>, vector<1x1x8x8x4xf32>
      %49 = vector.shape_cast %48 : vector<1x1x8x8x4xf32> to vector<8x8x4xf32>
      %50 = vector.shape_cast %49 : vector<8x8x4xf32> to vector<64x4xf32>
      %51 = vector.extract_strided_slice %13 {offsets = [5, 0], sizes = [1, 4], strides = [1, 1]} : vector<9x4xf32> to vector<1x4xf32>
      %52 = vector.broadcast %51 : vector<1x4xf32> to vector<64x4xf32>
      %53 = arith.mulf %50, %52 : vector<64x4xf32>
      %54 = arith.addf %47, %53 : vector<64x4xf32>
      %c0_39 = arith.constant 0 : index
      %c0_40 = arith.constant 0 : index
      %c1_41 = arith.constant 1 : index
      %c0_42 = arith.constant 0 : index
      %c0_43 = arith.constant 0 : index
      %55 = vector.load %arg2[%c0_39, %c0_40, %c1_41, %c0_42, %c0_43] : memref<1x4x9x9x4xf32, #tpu.memory_space<vmem>>, vector<1x1x8x8x4xf32>
      %56 = vector.shape_cast %55 : vector<1x1x8x8x4xf32> to vector<8x8x4xf32>
      %57 = vector.shape_cast %56 : vector<8x8x4xf32> to vector<64x4xf32>
      %58 = vector.extract_strided_slice %13 {offsets = [6, 0], sizes = [1, 4], strides = [1, 1]} : vector<9x4xf32> to vector<1x4xf32>
      %59 = vector.broadcast %58 : vector<1x4xf32> to vector<64x4xf32>
      %60 = arith.mulf %57, %59 : vector<64x4xf32>
      %61 = arith.addf %54, %60 : vector<64x4xf32>
      %c0_44 = arith.constant 0 : index
      %c1_45 = arith.constant 1 : index
      %c1_46 = arith.constant 1 : index
      %c0_47 = arith.constant 0 : index
      %c0_48 = arith.constant 0 : index
      %62 = vector.load %arg2[%c0_44, %c1_45, %c1_46, %c0_47, %c0_48] : memref<1x4x9x9x4xf32, #tpu.memory_space<vmem>>, vector<1x1x8x8x4xf32>
      %63 = vector.shape_cast %62 : vector<1x1x8x8x4xf32> to vector<8x8x4xf32>
      %64 = vector.shape_cast %63 : vector<8x8x4xf32> to vector<64x4xf32>
      %65 = vector.extract_strided_slice %13 {offsets = [7, 0], sizes = [1, 4], strides = [1, 1]} : vector<9x4xf32> to vector<1x4xf32>
      %66 = vector.broadcast %65 : vector<1x4xf32> to vector<64x4xf32>
      %67 = arith.mulf %64, %66 : vector<64x4xf32>
      %68 = arith.addf %61, %67 : vector<64x4xf32>
      %c0_49 = arith.constant 0 : index
      %c0_50 = arith.constant 0 : index
      %c1_51 = arith.constant 1 : index
      %c1_52 = arith.constant 1 : index
      %c0_53 = arith.constant 0 : index
      %69 = vector.load %arg2[%c0_49, %c0_50, %c1_51, %c1_52, %c0_53] : memref<1x4x9x9x4xf32, #tpu.memory_space<vmem>>, vector<1x1x8x8x4xf32>
      %70 = vector.shape_cast %69 : vector<1x1x8x8x4xf32> to vector<8x8x4xf32>
      %71 = vector.shape_cast %70 : vector<8x8x4xf32> to vector<64x4xf32>
      %72 = vector.extract_strided_slice %13 {offsets = [8, 0], sizes = [1, 4], strides = [1, 1]} : vector<9x4xf32> to vector<1x4xf32>
      %73 = vector.broadcast %72 : vector<1x4xf32> to vector<64x4xf32>
      %74 = arith.mulf %71, %73 : vector<64x4xf32>
      %75 = arith.addf %68, %74 : vector<64x4xf32>
      %c0_54 = arith.constant 0 : index
      %c0_55 = arith.constant 0 : index
      %76 = vector.load %arg7[%c0_54, %c0_55] : memref<64x4xf32, #tpu.memory_space<vmem>>, vector<64x4xf32>
      tpu.vector_store %arg7[%c0_54, %c0_55], %75 {strides = array<i32>} : memref<64x4xf32, #tpu.memory_space<vmem>>, vector<64x4xf32>,
    } else {
    }
    %c0 = arith.constant 0 : index
    %c0_1 = arith.constant 0 : index
    %3 = vector.load %arg7[%c0, %c0_1] : memref<64x4xf32, #tpu.memory_space<vmem>>, vector<64x4xf32>
    %c0_2 = arith.constant 0 : index
    %c0_3 = arith.constant 0 : index
    %4 = vector.load %arg4[%c0_2, %c0_3] : memref<4x128xf32, #tpu.memory_space<vmem>>, vector<4x128xf32>
    %cst = arith.constant dense<0.000000e+00> : vector<64x128xf32>
    %5 = tpu.matmul %3, %4, %cst {dimension_numbers = #tpu.dot_dimension_numbers<[1], [0], [0], [1], [0, 0, 1, 1], [], []>} : vector<64x4xf32>, vector<4x128xf32>, vector<64x128xf32> -> vector<64x128xf32>
    %c0_4 = arith.constant 0 : index
    %c0_5 = arith.constant 0 : index
    %6 = vector.load %arg5[%c0_4, %c0_5] : memref<1x128xf32, #tpu.memory_space<vmem>>, vector<1x128xf32>
    %7 = vector.broadcast %6 : vector<1x128xf32> to vector<64x128xf32>
    %8 = arith.addf %5, %7 : vector<64x128xf32>
    %9 = vector.shape_cast %8 : vector<64x128xf32> to vector<8x8x128xf32>
    %c0_6 = arith.constant 0 : index
    %c0_7 = arith.constant 0 : index
    %c0_8 = arith.constant 0 : index
    %c0_9 = arith.constant 0 : index
    %10 = vector.load %arg6[%c0_6, %c0_7, %c0_8, %c0_9] : memref<1x8x8x128xf32, #tpu.memory_space<vmem>>, vector<1x8x8x128xf32>
    %11 = vector.shape_cast %10 : vector<1x8x8x128xf32> to vector<8x8x128xf32>
    %12 = vector.shape_cast %9 : vector<8x8x128xf32> to vector<1x8x8x128xf32>
    tpu.vector_store %arg6[%c0_6, %c0_7, %c0_8, %c0_9], %12 {strides = array<i32>} : memref<1x8x8x128xf32, #tpu.memory_space<vmem>>, vector<1x8x8x128xf32>,
    return
  }
  func.func @transform_0(%arg0: i32, %arg1: i32) -> (i32, i32, i32, i32, i32) {
    %c0_i32 = arith.constant 0 : i32
    %c0_i32_0 = arith.constant 0 : i32
    %c0_i32_1 = arith.constant 0 : i32
    %c0_i32_2 = arith.constant 0 : i32
    %c0_i32_3 = arith.constant 0 : i32
    return %arg0, %c0_i32, %c0_i32_0, %c0_i32_1, %c0_i32_2 : i32, i32, i32, i32, i32
  }
  func.func @transform_1(%arg0: i32, %arg1: i32) -> (i32, i32) {
    %c0_i32 = arith.constant 0 : i32
    %c0_i32_0 = arith.constant 0 : i32
    %c0_i32_1 = arith.constant 0 : i32
    return %c0_i32, %c0_i32_0 : i32, i32
  }
  func.func @transform_2(%arg0: i32, %arg1: i32) -> (i32, i32) {
    %c0_i32 = arith.constant 0 : i32
    %c0_i32_0 = arith.constant 0 : i32
    return %c0_i32, %arg1 : i32, i32
  }
  func.func @transform_3(%arg0: i32, %arg1: i32) -> (i32, i32) {
    %c0_i32 = arith.constant 0 : i32
    %c0_i32_0 = arith.constant 0 : i32
    return %c0_i32, %arg1 : i32, i32
  }
  func.func @transform_4(%arg0: i32, %arg1: i32) -> (i32, i32, i32, i32) {
    %c0_i32 = arith.constant 0 : i32
    %c0_i32_0 = arith.constant 0 : i32
    %c0_i32_1 = arith.constant 0 : i32
    return %arg0, %c0_i32, %c0_i32_0, %arg1 : i32, i32, i32, i32
  }
}

</mosaic_0001>

<llo_original>
// kernel: tpu_custom_call.1
$region0: #{tpu_custom_call.1}
  #allocation0 [shape = 'u32[]', space=smem, size = 0x4, offset = 0x4, fixed_abs, tag = 'smem constant byte address 0x4 - core index']
  #allocation1 [shape = 'u32[144,128]{1,0:T(1,128)}', space=vmem, size = 0x12000, scoped, tag = 'internal scratch']
  #allocation2 [shape = 'f32[64,4]{1,0:T(8,128)}', space=vmem, size = 0x8000, scoped, tag = 'scratch operand']
  %s0 = inlined_call_operand.vmem [shape: f32[2,4,9,9,4], index: 0, kind: input, shape index: {}]
  %s1 = inlined_call_operand.vmem [shape: f32[9,4], index: 1, kind: input, shape index: {}]
  %s2 = inlined_call_operand.vmem [shape: f32[4,128], index: 2, kind: input, shape index: {}]
  %s3 = inlined_call_operand.vmem [shape: f32[1,128], index: 3, kind: input, shape index: {}]
  %s4 = inlined_call_operand.hbm [shape: f32[2,8,8,128], index: 4, kind: output, shape index: {}]
  %s5 = sld [smem:[#allocation0]]
  $region53: #{tpu_custom_call.1} parent=0
    _
  %s7 = ssub.s32 1, %s5
  %s8 = scalar_select 0, %s7, %s5
  $region1: #{tpu_custom_call.1} parent=0
    #allocation3 [shape = 'u8[65536]{0}', space=vmem, size = 0x10000, scoped, tag = 'output window, operand 0']
    #allocation4 [shape = 's32[2]{0}', space=sflag, size = 0x8, scoped, tag = 'scoped memory for tpu_custom_call.1']
    %9 = vsyncpa [#allocation4], 0
    %s10 = scalar_lea.sflag [#allocation4], 1
    %11 = vsyncpa %s10, 0
    loop: start=0, step=1, limit=4
    $region2: #{tpu_custom_call.1} parent=1 // loop_pre_header
      _
    $region3: #{tpu_custom_call.1} parent=1 // loop_header
      %s13 = sphi 0, %s17
      %p14 = scmp.ge.s32.totalorder %s13, 4
      %s20 = sphi 0, %s32
      %s21 = sphi 0, %s28
      %s22 = sphi 0, %s20
      %s23 = sphi 0, %s21
      %s24 = sphi 0, %s22
      %s25 = sphi 0, %s23
      %s35 = sphi 0, %s37
      %s38 = sphi 0, %s35
      %s39 = sphi 0, %s38
      %s55 = sphi 0, %s39
      %s59 = sphi 0, %s59
      %s61 = sphi 0, %s59
      %s62 = sphi 0, %s61
      %s76 = sphi 0, %s62
      %s82 = sphi 0, %s84
      %s85 = sphi 0, %s82
      %s86 = sphi 0, %s85
      %s102 = sphi 0, %s86
      %s108 = sphi 0, %s110
      %s111 = sphi 0, %s108
      %s112 = sphi 0, %s111
      %s128 = sphi 0, %s112
      %s136 = sphi 0, %s138
      %s139 = sphi 0, %s136
      %s140 = sphi 0, %s139
      %s156 = sphi 0, %s140
    $region4: #{tpu_custom_call.1} parent=1 // loop_header_branch
      %16 = sbr.rel (%p14) target = $region8
    $region5: #{tpu_custom_call.1} parent=1 // loop_body
      %s18 = ssub.s32 %s13, 1
      %s19 = ssub.s32 %s13, 2
      %s26 = sadd.s32 1, %s21
      %p27 = scmp.ge.s32.totalorder %s26, 1
      %s28 = scalar_select %p27, 0, %s26
      %s29 = sadd.s32 1, %s20
      %s30 = scalar_select %p27, %s29, %s20
      %p31 = scmp.ge.s32.totalorder %s30, 2
      %s32 = scalar_select %p31, 0, %s30
      %s33 = ssub.s32 %s20, %s32
      %p34 = scmp.eq.s32.totalorder %s33, 0
      %s36 = sadd.s32 %s35, 1
      %s37 = scalar_select %p34, %s35, %s36
      %p40 = pneg %p34
      %p41 = scmp.eq.s32.totalorder %s13, 1
      %p42 = por %p40, %p41
      %p43 = scmp.ne.s32.totalorder %s35, %s38
      %p44 = scmp.eq.s32.totalorder %s13, 0
      %p45 = por %p43, %p44
      %p46 = scmp.ne.s32.totalorder %s35, %s38
      %p47 = scmp.eq.s32.totalorder %s18, 1
      %p48 = por %p46, %p47
      %p49 = scmp.ne.s32.totalorder %s38, %s39
      %p50 = scmp.eq.s32.totalorder %s18, 0
      %p51 = por %p49, %p50
      %p52 = scmp.ne.s32.totalorder %s38, %s39
      %p53 = scmp.eq.s32.totalorder %s19, 1
      %p54 = por %p52, %p53
      %p56 = scmp.ne.s32.totalorder %s39, %s55
      %p57 = scmp.eq.s32.totalorder %s19, 0
      %p58 = por %p56, %p57
      %s60 = sadd.s32 %s59, 1
      %p63 = scmp.eq.s32.totalorder %s13, 1
      %p64 = scmp.ne.s32.totalorder %s59, %s61
      %p65 = scmp.eq.s32.totalorder %s13, 0
      %p66 = por %p64, %p65
      %p67 = scmp.ne.s32.totalorder %s59, %s61
      %p68 = scmp.eq.s32.totalorder %s18, 1
      %p69 = por %p67, %p68
      %p70 = scmp.ne.s32.totalorder %s61, %s62
      %p71 = scmp.eq.s32.totalorder %s18, 0
      %p72 = por %p70, %p71
      %p73 = scmp.ne.s32.totalorder %s61, %s62
      %p74 = scmp.eq.s32.totalorder %s19, 1
      %p75 = por %p73, %p74
      %p77 = scmp.ne.s32.totalorder %s62, %s76
      %p78 = scmp.eq.s32.totalorder %s19, 0
      %p79 = por %p77, %p78
      %s80 = ssub.s32 %s21, %s28
      %p81 = scmp.eq.s32.totalorder %s80, 0
      %s83 = sadd.s32 %s82, 1
      %s84 = scalar_select %p81, %s82, %s83
      %p87 = pneg %p81
      %p88 = scmp.eq.s32.totalorder %s13, 1
      %p89 = por %p87, %p88
      %p90 = scmp.ne.s32.totalorder %s82, %s85
      %p91 = scmp.eq.s32.totalorder %s13, 0
      %p92 = por %p90, %p91
      %p93 = scmp.ne.s32.totalorder %s82, %s85
      %p94 = scmp.eq.s32.totalorder %s18, 1
      %p95 = por %p93, %p94
      %p96 = scmp.ne.s32.totalorder %s85, %s86
      %p97 = scmp.eq.s32.totalorder %s18, 0
      %p98 = por %p96, %p97
      %p99 = scmp.ne.s32.totalorder %s85, %s86
      %p100 = scmp.eq.s32.totalorder %s19, 1
      %p101 = por %p99, %p100
      %p103 = scmp.ne.s32.totalorder %s86, %s102
      %p104 = scmp.eq.s32.totalorder %s19, 0
      %p105 = por %p103, %p104
      %s106 = ssub.s32 %s21, %s28
      %p107 = scmp.eq.s32.totalorder %s106, 0
      %s109 = sadd.s32 %s108, 1
      %s110 = scalar_select %p107, %s108, %s109
      %p113 = pneg %p107
      %p114 = scmp.eq.s32.totalorder %s13, 1
      %p115 = por %p113, %p114
      %p116 = scmp.ne.s32.totalorder %s108, %s111
      %p117 = scmp.eq.s32.totalorder %s13, 0
      %p118 = por %p116, %p117
      %p119 = scmp.ne.s32.totalorder %s108, %s111
      %p120 = scmp.eq.s32.totalorder %s18, 1
      %p121 = por %p119, %p120
      %p122 = scmp.ne.s32.totalorder %s111, %s112
      %p123 = scmp.eq.s32.totalorder %s18, 0
      %p124 = por %p122, %p123
      %p125 = scmp.ne.s32.totalorder %s111, %s112
      %p126 = scmp.eq.s32.totalorder %s19, 1
      %p127 = por %p125, %p126
      %p129 = scmp.ne.s32.totalorder %s112, %s128
      %p130 = scmp.eq.s32.totalorder %s19, 0
      %p131 = por %p129, %p130
      %s132 = ssub.s32 %s20, %s32
      %s133 = ssub.s32 %s21, %s28
      %s134 = sor.u32 %s132, %s133
      %p135 = scmp.eq.s32.totalorder %s134, 0
      %s137 = sadd.s32 %s136, 1
      %s138 = scalar_select %p135, %s136, %s137
      %p141 = pneg %p135
      %p142 = scmp.eq.s32.totalorder %s13, 1
      %p143 = por %p141, %p142
      %p144 = scmp.ne.s32.totalorder %s136, %s139
      %p145 = scmp.eq.s32.totalorder %s13, 0
      %p146 = por %p144, %p145
      %p147 = scmp.ne.s32.totalorder %s136, %s139
      %p148 = scmp.eq.s32.totalorder %s18, 1
      %p149 = por %p147, %p148
      %p150 = scmp.ne.s32.totalorder %s139, %s140
      %p151 = scmp.eq.s32.totalorder %s18, 0
      %p152 = por %p150, %p151
      %p153 = scmp.ne.s32.totalorder %s139, %s140
      %p154 = scmp.eq.s32.totalorder %s19, 1
      %p155 = por %p153, %p154
      %p157 = scmp.ne.s32.totalorder %s140, %s156
      %p158 = scmp.eq.s32.totalorder %s19, 0
      %p159 = por %p157, %p158
      %p160 = scmp.le.s32.totalorder 1, %s13
      %p161 = scmp.lt.s32.totalorder %s13, 3
      %p162 = pnand %p160, %p161
      %p163 = pneg %p162
      // Predicated region
      $region9: #{tpu_custom_call.1} parent=5 // pred_check
        _
      $region10: #{tpu_custom_call.1} parent=5 // pred_check_branch
        %165 = sbr.rel (%p162) target = $region12
      $region11: #{tpu_custom_call.1} parent=5 // pred_region
        %s166 = ssub.s32 %s13, 1
        // Predicated region
        $region13: #{tpu_custom_call.1} parent=11 // pred_check
          %p167 = pneg %p72
        $region14: #{tpu_custom_call.1} parent=11 // pred_check_branch
          %169 = sbr.rel (%p167) target = $region16
        $region15: #{tpu_custom_call.1} parent=11 // pred_region
          _
        $region16: #{tpu_custom_call.1} parent=11 // pred_fallthru
          _
        // Predicated region
        $region17: #{tpu_custom_call.1} parent=11 // pred_check
          %p170 = pneg %p98
        $region18: #{tpu_custom_call.1} parent=11 // pred_check_branch
          %172 = sbr.rel (%p170) target = $region20
        $region19: #{tpu_custom_call.1} parent=11 // pred_region
          %p173 = scmp.lt.s32.totalorder %s23, 0
          %s174 = scalar_select %p173, %s23, 0
          %s175 = smul.addr %s174, 4
          %s176 = scalar_lea.vmem %s2, %s175
        $region20: #{tpu_custom_call.1} parent=11 // pred_fallthru
          _
        // Predicated region
        $region21: #{tpu_custom_call.1} parent=11 // pred_check
          %p177 = pneg %p124
        $region22: #{tpu_custom_call.1} parent=11 // pred_check_branch
          %179 = sbr.rel (%p177) target = $region24
        $region23: #{tpu_custom_call.1} parent=11 // pred_region
          %p180 = scmp.lt.s32.totalorder %s23, 0
          %s181 = scalar_select %p180, %s23, 0
          %s182 = scalar_lea.vmem %s3, %s181
        $region24: #{tpu_custom_call.1} parent=11 // pred_fallthru
          _
      $region12: #{tpu_custom_call.1} parent=5 // pred_fallthru
        _
      %p183 = scmp.lt.s32.totalorder %s13, 2
      // Predicated region
      $region25: #{tpu_custom_call.1} parent=5 // pred_check
        %p184 = pneg %p183
      $region26: #{tpu_custom_call.1} parent=5 // pred_check_branch
        %186 = sbr.rel (%p184) target = $region28
      $region27: #{tpu_custom_call.1} parent=5 // pred_region
        // Predicated region
        $region29: #{tpu_custom_call.1} parent=27 // pred_check
          %p187 = pneg %p45
        $region30: #{tpu_custom_call.1} parent=27 // pred_check_branch
          %189 = sbr.rel (%p187) target = $region32
        $region31: #{tpu_custom_call.1} parent=27 // pred_region
          %p190 = scmp.lt.s32.totalorder %s20, 1
          %s191 = scalar_select %p190, %s20, 1
          %s192 = smul.addr %s191, 72
          %s193 = smul.addr %s192, 8
          %s194 = scalar_lea.vmem %s0, %s193
        $region32: #{tpu_custom_call.1} parent=27 // pred_fallthru
          _
      $region28: #{tpu_custom_call.1} parent=5 // pred_fallthru
        _
      %p195 = scmp.le.s32.totalorder 1, %s13
      %p196 = scmp.lt.s32.totalorder %s13, 3
      %p197 = pnand %p195, %p196
      %p198 = pneg %p197
      // Predicated region
      $region33: #{tpu_custom_call.1} parent=5 // pred_check
        _
      $region34: #{tpu_custom_call.1} parent=5 // pred_check_branch
        %200 = sbr.rel (%p197) target = $region36
      $region35: #{tpu_custom_call.1} parent=5 // pred_region
        %s201 = ssub.s32 %s13, 1
        %p202 = scmp.lt.s32.totalorder %s22, 1
        %s203 = scalar_select %p202, %s22, 1
        %s204 = smul.addr %s203, 72
        %s205 = smul.addr %s204, 8
        %s206 = scalar_lea.vmem %s0, %s205
        %p207 = pneg %p51
        %p208 = pneg %p48
        %p209 = pneg %p72
        %p210 = pneg %p69
        %p211 = scmp.lt.s32.totalorder %s23, 0
        %s212 = scalar_select %p211, %s23, 0
        %s213 = smul.addr %s212, 4
        %s214 = scalar_lea.vmem %s2, %s213
        %p215 = pneg %p98
        %p216 = pneg %p95
        %p217 = scmp.lt.s32.totalorder %s23, 0
        %s218 = scalar_select %p217, %s23, 0
        %s219 = scalar_lea.vmem %s3, %s218
        %p220 = pneg %p124
        %p221 = pneg %p121
        %p222 = pneg %p152
        %p223 = pneg %p149
        %s224 = sand.u32 %s139, 1
        %s225 = scalar_lea.sflag [#allocation4], %s224
        %s226 = sand.u32 %s139, 1
        %s227 = smul.addr %s226, 64
        %s228 = scalar_lea.vmem [#allocation3], %s227
        %p229 = scmp.lt.s32.totalorder %s22, 1
        %s230 = scalar_select %p229, %s22, 1
        %s231 = smul.addr %s230, 72
        %s232 = smul.addr %s231, 8
        %s233 = scalar_lea.vmem %s0, %s232
        %p234 = scmp.lt.s32.totalorder %s23, 0
        %s235 = scalar_select %p234, %s23, 0
        %s236 = smul.addr %s235, 4
        %s237 = scalar_lea.vmem %s2, %s236
        %p238 = scmp.lt.s32.totalorder %s23, 0
        %s239 = scalar_select %p238, %s23, 0
        %s240 = scalar_lea.vmem %s3, %s239
        %p241 = scmp.eq.s32.totalorder %s23, 0
        // Predicated region
        $region37: #{tpu_custom_call.1} parent=35 // pred_check
          %p242 = pneg %p241
        $region38: #{tpu_custom_call.1} parent=35 // pred_check_branch
          %244 = sbr.rel (%p242) target = $region40
        $region39: #{tpu_custom_call.1} parent=35 // pred_region
          %v245 = vld [vmem:[%s1] sm:$0xff]
          %v246 = vld [vmem:[%s1 + $0x8] sm:$0x1]
          %v247 = vld [vmem:[%s233] sm:$0xff]
          %v248 = vld [vmem:[%s233 + $0x10] sm:$0xff]
          %v249 = vld [vmem:[%s233 + $0x20] sm:$0xff]
          %v250 = vld [vmem:[%s233 + $0x30] sm:$0xff]
          %v251 = vld [vmem:[%s233 + $0x40] sm:$0xff]
          %v252 = vld [vmem:[%s233 + $0x50] sm:$0xff]
          %v253 = vld [vmem:[%s233 + $0x60] sm:$0xff]
          %v254 = vld [vmem:[%s233 + $0x70] sm:$0xff]
          %v255 = vlaneseq
          %v256 = vshrl.u32 %v255, 7
          %v257 = vsub.s32 0, %v256
          %v258 = vrot.slane %v245, %v257
          %v259 = vmul.f32 %v247, %v258
          %v260 = vmul.f32 %v248, %v258
          %v261 = vmul.f32 %v249, %v258
          %v262 = vmul.f32 %v250, %v258
          %v263 = vmul.f32 %v251, %v258
          %v264 = vmul.f32 %v252, %v258
          %v265 = vmul.f32 %v253, %v258
          %v266 = vmul.f32 %v254, %v258
          %s267 = scalar_lea.vmem %s233, 144
          %v268 = vld [vmem:[%s267] sm:$0xff]
          %v269 = vld [vmem:[%s267 + $0x10] sm:$0xff]
          %v270 = vld [vmem:[%s267 + $0x20] sm:$0xff]
          %v271 = vld [vmem:[%s267 + $0x30] sm:$0xff]
          %v272 = vld [vmem:[%s267 + $0x40] sm:$0xff]
          %v273 = vld [vmem:[%s267 + $0x50] sm:$0xff]
          %v274 = vld [vmem:[%s267 + $0x60] sm:$0xff]
          %v275 = vld [vmem:[%s267 + $0x70] sm:$0xff]
          %v276 = vlaneseq
          %v277 = vshrl.u32 %v276, 7
          %v278 = vsub.s32 1, %v277
          %v279 = vrot.slane %v245, %v278
          %v280 = vmul.f32 %v268, %v279
          %v281 = vmul.f32 %v269, %v279
          %v282 = vmul.f32 %v270, %v279
          %v283 = vmul.f32 %v271, %v279
          %v284 = vmul.f32 %v272, %v279
          %v285 = vmul.f32 %v273, %v279
          %v286 = vmul.f32 %v274, %v279
          %v287 = vmul.f32 %v275, %v279
          %v288 = vadd.f32 %v259, %v280
          %v289 = vadd.f32 %v260, %v281
          %v290 = vadd.f32 %v261, %v282
          %v291 = vadd.f32 %v262, %v283
          %v292 = vadd.f32 %v263, %v284
          %v293 = vadd.f32 %v264, %v285
          %v294 = vadd.f32 %v265, %v286
          %v295 = vadd.f32 %v266, %v287
          %v296 = vld [vmem:[%s233 + $0x1] sm:$0xff]
          %v297 = vld [vmem:[%s233 + $0x11] sm:$0xff]
          %v298 = vld [vmem:[%s233 + $0x21] sm:$0xff]
          %v299 = vld [vmem:[%s233 + $0x31] sm:$0xff]
          %v300 = vld [vmem:[%s233 + $0x41] sm:$0xff]
          %v301 = vld [vmem:[%s233 + $0x51] sm:$0xff]
          %v302 = vld [vmem:[%s233 + $0x61] sm:$0xff]
          %v303 = vld [vmem:[%s233 + $0x71] sm:$0xff]
          %v304 = vlaneseq
          %v305 = vshrl.u32 %v304, 7
          %v306 = vsub.s32 2, %v305
          %v307 = vrot.slane %v245, %v306
          %v308 = vmul.f32 %v296, %v307
          %v309 = vmul.f32 %v297, %v307
          %v310 = vmul.f32 %v298, %v307
          %v311 = vmul.f32 %v299, %v307
          %v312 = vmul.f32 %v300, %v307
          %v313 = vmul.f32 %v301, %v307
          %v314 = vmul.f32 %v302, %v307
          %v315 = vmul.f32 %v303, %v307
          %v316 = vadd.f32 %v288, %v308
          %v317 = vadd.f32 %v289, %v309
          %v318 = vadd.f32 %v290, %v310
          %v319 = vadd.f32 %v291, %v311
          %v320 = vadd.f32 %v292, %v312
          %v321 = vadd.f32 %v293, %v313
          %v322 = vadd.f32 %v294, %v314
          %v323 = vadd.f32 %v295, %v315
          %s324 = scalar_lea.vmem %s233, 288
          %v325 = vld [vmem:[%s324] sm:$0xff]
          %v326 = vld [vmem:[%s324 + $0x10] sm:$0xff]
          %v327 = vld [vmem:[%s324 + $0x20] sm:$0xff]
          %v328 = vld [vmem:[%s324 + $0x30] sm:$0xff]
          %v329 = vld [vmem:[%s324 + $0x40] sm:$0xff]
          %v330 = vld [vmem:[%s324 + $0x50] sm:$0xff]
          %v331 = vld [vmem:[%s324 + $0x60] sm:$0xff]
          %v332 = vld [vmem:[%s324 + $0x70] sm:$0xff]
          %v333 = vlaneseq
          %v334 = vshrl.u32 %v333, 7
          %v335 = vsub.s32 3, %v334
          %v336 = vrot.slane %v245, %v335
          %v337 = vmul.f32 %v325, %v336
          %v338 = vmul.f32 %v326, %v336
          %v339 = vmul.f32 %v327, %v336
          %v340 = vmul.f32 %v328, %v336
          %v341 = vmul.f32 %v329, %v336
          %v342 = vmul.f32 %v330, %v336
          %v343 = vmul.f32 %v331, %v336
          %v344 = vmul.f32 %v332, %v336
          %v345 = vadd.f32 %v316, %v337
          %v346 = vadd.f32 %v317, %v338
          %v347 = vadd.f32 %v318, %v339
          %v348 = vadd.f32 %v319, %v340
          %v349 = vadd.f32 %v320, %v341
          %v350 = vadd.f32 %v321, %v342
          %v351 = vadd.f32 %v322, %v343
          %v352 = vadd.f32 %v323, %v344
          %s353 = scalar_lea.vmem %s233, 432
          %v354 = vld [vmem:[%s353] sm:$0xff]
          %v355 = vld [vmem:[%s353 + $0x10] sm:$0xff]
          %v356 = vld [vmem:[%s353 + $0x20] sm:$0xff]
          %v357 = vld [vmem:[%s353 + $0x30] sm:$0xff]
          %v358 = vld [vmem:[%s353 + $0x40] sm:$0xff]
          %v359 = vld [vmem:[%s353 + $0x50] sm:$0xff]
          %v360 = vld [vmem:[%s353 + $0x60] sm:$0xff]
          %v361 = vld [vmem:[%s353 + $0x70] sm:$0xff]
          %v362 = vlaneseq
          %v363 = vshrl.u32 %v362, 7
          %v364 = vsub.s32 4, %v363
          %v365 = vrot.slane %v245, %v364
          %v366 = vmul.f32 %v354, %v365
          %v367 = vmul.f32 %v355, %v365
          %v368 = vmul.f32 %v356, %v365
          %v369 = vmul.f32 %v357, %v365
          %v370 = vmul.f32 %v358, %v365
          %v371 = vmul.f32 %v359, %v365
          %v372 = vmul.f32 %v360, %v365
          %v373 = vmul.f32 %v361, %v365
          %v374 = vadd.f32 %v345, %v366
          %v375 = vadd.f32 %v346, %v367
          %v376 = vadd.f32 %v347, %v368
          %v377 = vadd.f32 %v348, %v369
          %v378 = vadd.f32 %v349, %v370
          %v379 = vadd.f32 %v350, %v371
          %v380 = vadd.f32 %v351, %v372
          %v381 = vadd.f32 %v352, %v373
          %v382 = vld [vmem:[%s324 + $0x1] sm:$0xff]
          %v383 = vld [vmem:[%s324 + $0x11] sm:$0xff]
          %v384 = vld [vmem:[%s324 + $0x21] sm:$0xff]
          %v385 = vld [vmem:[%s324 + $0x31] sm:$0xff]
          %v386 = vld [vmem:[%s324 + $0x41] sm:$0xff]
          %v387 = vld [vmem:[%s324 + $0x51] sm:$0xff]
          %v388 = vld [vmem:[%s324 + $0x61] sm:$0xff]
          %v389 = vld [vmem:[%s324 + $0x71] sm:$0xff]
          %v390 = vlaneseq
          %v391 = vshrl.u32 %v390, 7
          %v392 = vsub.s32 5, %v391
          %v393 = vrot.slane %v245, %v392
          %v394 = vmul.f32 %v382, %v393
          %v395 = vmul.f32 %v383, %v393
          %v396 = vmul.f32 %v384, %v393
          %v397 = vmul.f32 %v385, %v393
          %v398 = vmul.f32 %v386, %v393
          %v399 = vmul.f32 %v387, %v393
          %v400 = vmul.f32 %v388, %v393
          %v401 = vmul.f32 %v389, %v393
          %v402 = vadd.f32 %v374, %v394
          %v403 = vadd.f32 %v375, %v395
          %v404 = vadd.f32 %v376, %v396
          %v405 = vadd.f32 %v377, %v397
          %v406 = vadd.f32 %v378, %v398
          %v407 = vadd.f32 %v379, %v399
          %v408 = vadd.f32 %v380, %v400
          %v409 = vadd.f32 %v381, %v401
          %s410 = scalar_lea.vmem %s233, 16
          %v411 = vld [vmem:[%s410] sm:$0xff]
          %v412 = vld [vmem:[%s410 + $0x10] sm:$0xff]
          %v413 = vld [vmem:[%s410 + $0x20] sm:$0xff]
          %v414 = vld [vmem:[%s410 + $0x30] sm:$0xff]
          %v415 = vld [vmem:[%s410 + $0x40] sm:$0xff]
          %v416 = vld [vmem:[%s410 + $0x50] sm:$0xff]
          %v417 = vld [vmem:[%s410 + $0x60] sm:$0xff]
          %v418 = vld [vmem:[%s410 + $0x70] sm:$0xff]
          %v419 = vlaneseq
          %v420 = vshrl.u32 %v419, 7
          %v421 = vsub.s32 6, %v420
          %v422 = vrot.slane %v245, %v421
          %v423 = vmul.f32 %v411, %v422
          %v424 = vmul.f32 %v412, %v422
          %v425 = vmul.f32 %v413, %v422
          %v426 = vmul.f32 %v414, %v422
          %v427 = vmul.f32 %v415, %v422
          %v428 = vmul.f32 %v416, %v422
          %v429 = vmul.f32 %v417, %v422
          %v430 = vmul.f32 %v418, %v422
          %v431 = vadd.f32 %v402, %v423
          %v432 = vadd.f32 %v403, %v424
          %v433 = vadd.f32 %v404, %v425
          %v434 = vadd.f32 %v405, %v426
          %v435 = vadd.f32 %v406, %v427
          %v436 = vadd.f32 %v407, %v428
          %v437 = vadd.f32 %v408, %v429
          %v438 = vadd.f32 %v409, %v430
          %s439 = scalar_lea.vmem %s233, 160
          %v440 = vld [vmem:[%s439] sm:$0xff]
          %v441 = vld [vmem:[%s439 + $0x10] sm:$0xff]
          %v442 = vld [vmem:[%s439 + $0x20] sm:$0xff]
          %v443 = vld [vmem:[%s439 + $0x30] sm:$0xff]
          %v444 = vld [vmem:[%s439 + $0x40] sm:$0xff]
          %v445 = vld [vmem:[%s439 + $0x50] sm:$0xff]
          %v446 = vld [vmem:[%s439 + $0x60] sm:$0xff]
          %v447 = vld [vmem:[%s439 + $0x70] sm:$0xff]
          %v448 = vlaneseq
          %v449 = vshrl.u32 %v448, 7
          %v450 = vsub.s32 7, %v449
          %v451 = vrot.slane %v245, %v450
          %v452 = vmul.f32 %v440, %v451
          %v453 = vmul.f32 %v441, %v451
          %v454 = vmul.f32 %v442, %v451
          %v455 = vmul.f32 %v443, %v451
          %v456 = vmul.f32 %v444, %v451
          %v457 = vmul.f32 %v445, %v451
          %v458 = vmul.f32 %v446, %v451
          %v459 = vmul.f32 %v447, %v451
          %v460 = vadd.f32 %v431, %v452
          %v461 = vadd.f32 %v432, %v453
          %v462 = vadd.f32 %v433, %v454
          %v463 = vadd.f32 %v434, %v455
          %v464 = vadd.f32 %v435, %v456
          %v465 = vadd.f32 %v436, %v457
          %v466 = vadd.f32 %v437, %v458
          %v467 = vadd.f32 %v438, %v459
          %v468 = vld [vmem:[%s410 + $0x1] sm:$0xff]
          %v469 = vld [vmem:[%s410 + $0x11] sm:$0xff]
          %v470 = vld [vmem:[%s410 + $0x21] sm:$0xff]
          %v471 = vld [vmem:[%s410 + $0x31] sm:$0xff]
          %v472 = vld [vmem:[%s410 + $0x41] sm:$0xff]
          %v473 = vld [vmem:[%s410 + $0x51] sm:$0xff]
          %v474 = vld [vmem:[%s410 + $0x61] sm:$0xff]
          %v475 = vld [vmem:[%s410 + $0x71] sm:$0xff]
          %v476 = vlaneseq
          %v477 = vshrl.u32 %v476, 7
          %v478 = vsub.s32 0, %v477
          %v479 = vrot.slane %v246, %v478
          %v480 = vmul.f32 %v468, %v479
          %v481 = vmul.f32 %v469, %v479
          %v482 = vmul.f32 %v470, %v479
          %v483 = vmul.f32 %v471, %v479
          %v484 = vmul.f32 %v472, %v479
          %v485 = vmul.f32 %v473, %v479
          %v486 = vmul.f32 %v474, %v479
          %v487 = vmul.f32 %v475, %v479
          %v488 = vadd.f32 %v460, %v480
          %v489 = vadd.f32 %v461, %v481
          %v490 = vadd.f32 %v462, %v482
          %v491 = vadd.f32 %v463, %v483
          %v492 = vadd.f32 %v464, %v484
          %v493 = vadd.f32 %v465, %v485
          %v494 = vadd.f32 %v466, %v486
          %v495 = vadd.f32 %v467, %v487
          %vm496 = vcmask 31744
          %497 = vst.msk [vmem:[#allocation2] sm:$0xff] %vm496, %v488
          %498 = vst.msk [vmem:[#allocation2 + $0x8] sm:$0xff] %vm496, %v489
          %499 = vst.msk [vmem:[#allocation2 + $0x10] sm:$0xff] %vm496, %v490
          %500 = vst.msk [vmem:[#allocation2 + $0x18] sm:$0xff] %vm496, %v491
          %501 = vst.msk [vmem:[#allocation2 + $0x20] sm:$0xff] %vm496, %v492
          %502 = vst.msk [vmem:[#allocation2 + $0x28] sm:$0xff] %vm496, %v493
          %503 = vst.msk [vmem:[#allocation2 + $0x30] sm:$0xff] %vm496, %v494
          %504 = vst.msk [vmem:[#allocation2 + $0x38] sm:$0xff] %vm496, %v495
        $region40: #{tpu_custom_call.1} parent=35 // pred_fallthru
          _
        %v505 = vld [vmem:[#allocation2] sm:$0xff]
        %v506 = vld [vmem:[#allocation2 + $0x8] sm:$0xff]
        %v507 = vld [vmem:[#allocation2 + $0x10] sm:$0xff]
        %v508 = vld [vmem:[#allocation2 + $0x18] sm:$0xff]
        %v509 = vld [vmem:[#allocation2 + $0x20] sm:$0xff]
        %v510 = vld [vmem:[#allocation2 + $0x28] sm:$0xff]
        %v511 = vld [vmem:[#allocation2 + $0x30] sm:$0xff]
        %v512 = vld [vmem:[#allocation2 + $0x38] sm:$0xff]
        %v513 = vld [vmem:[%s237] sm:$0xf]
        %v514 = vld [vmem:[%s240] sm:$0x1]
        %v516 = vlaneseq
        %v517 = vshrl.u32 %v516, 7
        %v518 = vsub.s32 0, %v517
        %v519 = vrot.slane %v514, %v518
        %vm521 = vcmask 31744
        %v523 = vsel %vm521, %v505, 0
        %v526 = vsel %vm521, %v506, 0
        %v529 = vsel %vm521, %v507, 0
        %v532 = vsel %vm521, %v508, 0
        %v535 = vsel %vm521, %v509, 0
        %v538 = vsel %vm521, %v510, 0
        %v541 = vsel %vm521, %v511, 0
        %v544 = vsel %vm521, %v512, 0
        %vm546 = vcmask 1043456
        %v548 = vsel %vm546, %v513, 0
        %550 = vmatprep.subr.mxu0 0.0
        %551 = vmatpush1.msra.mxu0 0.0
        %552 = vmatprep.subr.mxu0 0.0
        %553 = vmatpush1.msra.mxu0 0.0
        %554 = vmatprep.subr.mxu0 0.0
        %555 = vmatpush1.msra.mxu0 0.0
        %556 = vmatprep.subr.mxu0 0.0
        %557 = vmatpush1.msra.mxu0 0.0
        %558 = vmatprep.subr.mxu0 0.0
        %559 = vmatpush1.msra.mxu0 0.0
        %560 = vmatprep.subr.mxu0 0.0
        %561 = vmatpush1.msra.mxu0 0.0
        %562 = vmatprep.subr.mxu0 0.0
        %563 = vmatpush1.msra.mxu0 0.0
        %564 = vmatprep.subr.mxu0 0.0
        %565 = vmatpush1.msra.mxu0 0.0
        %566 = vmatprep.subr.mxu0 0.0
        %567 = vmatpush1.msra.mxu0 0.0
        %568 = vmatprep.subr.mxu0 0.0
        %569 = vmatpush1.msra.mxu0 0.0
        %570 = vmatprep.subr.mxu0 0.0
        %571 = vmatpush1.msra.mxu0 0.0
        %572 = vmatprep.subr.mxu0 0.0
        %573 = vmatpush1.msra.mxu0 0.0
        %574 = vmatprep.subr.mxu0 0.0
        %575 = vmatpush1.msra.mxu0 0.0
        %576 = vmatprep.subr.mxu0 0.0
        %577 = vmatpush1.msra.mxu0 0.0
        %578 = vmatprep.subr.mxu0 0.0
        %579 = vmatpush1.msra.mxu0 0.0
        %580 = vmatprep.subr.mxu0 0.0
        %581 = vmatpush1.msra.mxu0 %v548
        %582 = vmatprep.subr.mxu0 0.0
        %583 = vmatpush2.msra.mxu0 0.0
        %584 = vmatprep.subr.mxu0 0.0
        %585 = vmatpush2.msra.mxu0 0.0
        %586 = vmatprep.subr.mxu0 0.0
        %587 = vmatpush2.msra.mxu0 0.0
        %588 = vmatprep.subr.mxu0 0.0
        %589 = vmatpush2.msra.mxu0 0.0
        %590 = vmatprep.subr.mxu0 0.0
        %591 = vmatpush2.msra.mxu0 0.0
        %592 = vmatprep.subr.mxu0 0.0
        %593 = vmatpush2.msra.mxu0 0.0
        %594 = vmatprep.subr.mxu0 0.0
        %595 = vmatpush2.msra.mxu0 0.0
        %596 = vmatprep.subr.mxu0 0.0
        %597 = vmatpush2.msra.mxu0 0.0
        %598 = vmatprep.subr.mxu0 0.0
        %599 = vmatpush2.msra.mxu0 0.0
        %600 = vmatprep.subr.mxu0 0.0
        %601 = vmatpush2.msra.mxu0 0.0
        %602 = vmatprep.subr.mxu0 0.0
        %603 = vmatpush2.msra.mxu0 0.0
        %604 = vmatprep.subr.mxu0 0.0
        %605 = vmatpush2.msra.mxu0 0.0
        %606 = vmatprep.subr.mxu0 0.0
        %607 = vmatpush2.msra.mxu0 0.0
        %608 = vmatprep.subr.mxu0 0.0
        %609 = vmatpush2.msra.mxu0 0.0
        %610 = vmatprep.subr.mxu0 0.0
        %611 = vmatpush2.msra.mxu0 0.0
        %612 = vmatprep.subr.mxu0 0.0
        %613 = vmatpush2.msra.mxu0 0.0
        %614 = vmatprep.mubr.f32.mxu0 0.0
        %615 = vmatmul.mubr.f32.gmra.mxu0 %v523
        %v616 = vpop.f32.mrf.mxu0
        %v617 = vadd.f32 %v519, %v616
        %v618 = vpop.f32.mrf.mxu0
        %619 = vmatprep.mubr.f32.mxu0 0.0
        %620 = vmatmul.mubr.f32.gmra.mxu0 %v526
        %v621 = vpop.f32.mrf.mxu0
        %v622 = vadd.f32 %v519, %v621
        %v623 = vpop.f32.mrf.mxu0
        %624 = vmatprep.mubr.f32.mxu0 0.0
        %625 = vmatmul.mubr.f32.gmra.mxu0 %v529
        %v626 = vpop.f32.mrf.mxu0
        %v627 = vadd.f32 %v519, %v626
        %v628 = vpop.f32.mrf.mxu0
        %629 = vmatprep.mubr.f32.mxu0 0.0
        %630 = vmatmul.mubr.f32.gmra.mxu0 %v532
        %v631 = vpop.f32.mrf.mxu0
        %v632 = vadd.f32 %v519, %v631
        %v633 = vpop.f32.mrf.mxu0
        %634 = vmatprep.mubr.f32.mxu0 0.0
        %635 = vmatmul.mubr.f32.gmra.mxu0 %v535
        %v636 = vpop.f32.mrf.mxu0
        %v637 = vadd.f32 %v519, %v636
        %v638 = vpop.f32.mrf.mxu0
        %639 = vmatprep.mubr.f32.mxu0 0.0
        %640 = vmatmul.mubr.f32.gmra.mxu0 %v538
        %v641 = vpop.f32.mrf.mxu0
        %v642 = vadd.f32 %v519, %v641
        %v643 = vpop.f32.mrf.mxu0
        %644 = vmatprep.mubr.f32.mxu0 0.0
        %645 = vmatmul.mubr.f32.gmra.mxu0 %v541
        %v646 = vpop.f32.mrf.mxu0
        %v647 = vadd.f32 %v519, %v646
        %v648 = vpop.f32.mrf.mxu0
        %649 = vmatprep.mubr.f32.mxu0 0.0
        %650 = vmatmul.mubr.f32.gmra.mxu0 %v544
        %v651 = vpop.f32.mrf.mxu0
        %v652 = vadd.f32 %v519, %v651
        %v653 = vpop.f32.mrf.mxu0
        %654 = vdwg.mxu0
        %655 = vst [vmem:[%s228] sm:$0xff] %v617
        %656 = vst [vmem:[%s228 + $0x8] sm:$0xff] %v622
        %657 = vst [vmem:[%s228 + $0x10] sm:$0xff] %v627
        %658 = vst [vmem:[%s228 + $0x18] sm:$0xff] %v632
        %659 = vst [vmem:[%s228 + $0x20] sm:$0xff] %v637
        %660 = vst [vmem:[%s228 + $0x28] sm:$0xff] %v642
        %661 = vst [vmem:[%s228 + $0x30] sm:$0xff] %v647
        %662 = vst [vmem:[%s228 + $0x38] sm:$0xff] %v652
        %s663 = sand.u32 %s139, 1
        %s664 = scalar_lea.sflag [#allocation4], %s663
        %s665 = sand.u32 %s139, 1
        %s666 = smul.addr %s665, 64
        %s667 = scalar_lea.vmem [#allocation3], %s666
        // Predicated region
        $region41: #{tpu_custom_call.1} parent=35 // pred_check
          %p668 = pneg %p149
        $region42: #{tpu_custom_call.1} parent=35 // pred_check_branch
          %670 = sbr.rel (%p668) target = $region44
        $region43: #{tpu_custom_call.1} parent=35 // pred_region
          %s672 = ssub.s32 1024, 1024
          %673 = vsyncadd %s664, %s672
          %s674 = smul.addr %s22, 8
          %s675 = sadd.s32 %s23, %s674
          %s676 = smul.addr %s675, 128
          %s677 = scalar_lea.hbm %s4, %s676
          %s678 = sshll.u32 %s667, 4
          %s679 = int_to_ptr.vmem [resolvable:$true] %s678
          %684 = dma.vmem_to_hbm [thread:$0]  %s679, 1024, %s677, %s664, 128, 128, 8
        $region44: #{tpu_custom_call.1} parent=35 // pred_fallthru
          _
      $region36: #{tpu_custom_call.1} parent=5 // pred_fallthru
        _
      %p685 = scmp.le.s32.totalorder 2, %s13
      // Predicated region
      $region45: #{tpu_custom_call.1} parent=5 // pred_check
        %p686 = pneg %p685
      $region46: #{tpu_custom_call.1} parent=5 // pred_check_branch
        %688 = sbr.rel (%p686) target = $region48
      $region47: #{tpu_custom_call.1} parent=5 // pred_region
        %s689 = ssub.s32 %s13, 2
        // Predicated region
        $region49: #{tpu_custom_call.1} parent=47 // pred_check
          %p690 = pneg %p155
        $region50: #{tpu_custom_call.1} parent=47 // pred_check_branch
          %692 = sbr.rel (%p690) target = $region52
        $region51: #{tpu_custom_call.1} parent=47 // pred_region
          %s693 = sand.u32 %s140, 1
          %s694 = scalar_lea.sflag [#allocation4], %s693
          %s695 = sand.u32 %s140, 1
          %s696 = smul.addr %s695, 64
          %s697 = scalar_lea.vmem [#allocation3], %s696
          %698 = dma.done %s694, 1024
        $region52: #{tpu_custom_call.1} parent=47 // pred_fallthru
          _
      $region48: #{tpu_custom_call.1} parent=5 // pred_fallthru
        _
    $region6: #{tpu_custom_call.1} parent=1 // loop_footer
      %s17 = sadd.s32 1, %s13
    $region7: #{tpu_custom_call.1} parent=1 // loop_footer_branch
      %12 = sbr.rel target = $region3
    $region8: #{tpu_custom_call.1} parent=1 // loop_exit
      _
    %699 = vsyncpa [#allocation4], 1
    %s700 = scalar_lea.sflag [#allocation4], 1
    %701 = vsyncpa %s700, 1

</llo_original>
